<compile_context>
chip_gen: v6e
topology: v6e:2x2x1
jax: 0.10.0
libtpu: 0.0.40
codegen_flags: <defaults>
</compile_context>

<pallas_src>
import jax
import jax.numpy as jnp
from jax.experimental import pallas as pl
from jax.experimental.pallas import tpu as pltpu

LANE = 128      # vreg lane width  (last dim)
SUBLANE = 8     # vreg sublanes    (second-to-last dim)


def _round_up(n, m):
    return ((n + m - 1) // m) * m


def _vmem_cap_bytes():
    """Generation-aware scoped-VMEM cap: ~56 MiB on v7x (64 MiB physical/TC),
    up to 100 MiB on v5e/v6e (128 MiB physical). Falls back to the v7x-safe
    value if the hardware query is unavailable."""
    try:
        phys = int(pltpu.get_tpu_info().vmem_capacity_bytes)
        return max(16 * 1024 * 1024,
                   min(phys - 8 * 1024 * 1024, 100 * 1024 * 1024))
    except Exception:
        return 56 * 1024 * 1024


# ----------------------------------------------------------------------------
# Kernels
# ----------------------------------------------------------------------------
def _mlp_kernel(x_ref, w1_ref, b1_ref, w2_ref, b2_ref, w3_ref, b3_ref, o_ref):
    # x arrives in native f32; bf16 cast happens in-kernel (cheap VPU filler).
    x = x_ref[...].astype(w1_ref.dtype)
    h1 = jnp.dot(x, w1_ref[...], preferred_element_type=jnp.float32) + b1_ref[...]
    h1 = jnp.maximum(h1, 0.0).astype(w2_ref.dtype)
    h2 = jnp.dot(h1, w2_ref[...], preferred_element_type=jnp.float32) + b2_ref[...]
    h2 = jnp.maximum(h2, 0.0).astype(w3_ref.dtype)
    out = jnp.dot(h2, w3_ref[...], preferred_element_type=jnp.float32) + b3_ref[...]
    o_ref[...] = out.astype(o_ref.dtype)


def _noisy_mlp_kernel(x_ref,
                      w1_ref, s1_ref, e1_ref, b1_ref, sb1_ref, eb1_ref,
                      w2_ref, s2_ref, e2_ref, b2_ref, sb2_ref, eb2_ref,
                      w3_ref, s3_ref, e3_ref, b3_ref, sb3_ref, eb3_ref,
                      o_ref,
                      ew1_sc, ew2_sc, ew3_sc, eb1_sc, eb2_sc, eb3_sc):
    # NoisyLinear path: effective weights/biases are formed ONCE (grid step 0)
    # into persistent VMEM scratch and reused by every later batch tile.
    # Requires the batch grid axis to be "arbitrary" (sequential on one core)
    # so step 0 is guaranteed to run before any other step reads the scratch.
    @pl.when(pl.program_id(0) == 0)
    def _():
        def eff_w(w, s, e):
            # combine in f32 (exact enough for the bf16 MXU inputs), store bf16
            return (w[...].astype(jnp.float32)
                    + s[...].astype(jnp.float32) * e[...].astype(jnp.float32)
                    ).astype(w.dtype)

        ew1_sc[...] = eff_w(w1_ref, s1_ref, e1_ref)
        ew2_sc[...] = eff_w(w2_ref, s2_ref, e2_ref)
        ew3_sc[...] = eff_w(w3_ref, s3_ref, e3_ref)
        eb1_sc[...] = b1_ref[...] + sb1_ref[...] * eb1_ref[...]
        eb2_sc[...] = b2_ref[...] + sb2_ref[...] * eb2_ref[...]
        eb3_sc[...] = b3_ref[...] + sb3_ref[...] * eb3_ref[...]

    x = x_ref[...].astype(ew1_sc.dtype)
    h1 = jnp.dot(x, ew1_sc[...], preferred_element_type=jnp.float32) + eb1_sc[...]
    h1 = jnp.maximum(h1, 0.0).astype(ew2_sc.dtype)
    h2 = jnp.dot(h1, ew2_sc[...], preferred_element_type=jnp.float32) + eb2_sc[...]
    h2 = jnp.maximum(h2, 0.0).astype(ew3_sc.dtype)
    out = jnp.dot(h2, ew3_sc[...], preferred_element_type=jnp.float32) + eb3_sc[...]
    o_ref[...] = out.astype(o_ref.dtype)


# ----------------------------------------------------------------------------
# One-time parameter preparation (hoisted out of the per-forward path)
# ----------------------------------------------------------------------------
def prepare_params(params, compute_dtype=jnp.bfloat16):
    """params = (w1, b1, w2, b2, w3, b3); w_i stored (in, out)."""
    cdt = jnp.dtype(compute_dtype)
    w1, b1, w2, b2, w3, b3 = params
    c = lambda a: jnp.asarray(a, cdt)
    f = lambda a: jnp.asarray(a, jnp.float32).reshape(1, -1)
    return (c(w1), f(b1), c(w2), f(b2), c(w3), f(b3))


def prepare_noisy_params(params, noisy_params, compute_dtype=jnp.bfloat16):
    """NoisyLinear (noise=True) path. noisy_params =
    (sw1, ew1, sb1, eb1, sw2, ew2, sb2, eb2, sw3, ew3, sb3, eb3).
    Call again after every resample() of the eps buffers."""
    cdt = jnp.dtype(compute_dtype)
    w1, b1, w2, b2, w3, b3 = params
    (sw1, ew1, sb1, eb1, sw2, ew2, sb2, eb2, sw3, ew3, sb3, eb3) = noisy_params
    c = lambda a: jnp.asarray(a, cdt)
    f = lambda a: jnp.asarray(a, jnp.float32).reshape(1, -1)
    return (c(w1), c(sw1), c(ew1), f(b1), f(sb1), f(eb1),
            c(w2), c(sw2), c(ew2), f(b2), f(sb2), f(eb2),
            c(w3), c(sw3), c(ew3), f(b3), f(sb3), f(eb3))


# ----------------------------------------------------------------------------
# Forward
# ----------------------------------------------------------------------------
def mlp_forward(x, prepared, *, block_b=1024):
    """relu(x@w1+b1) -> relu(@w2+b2) -> @w3+b3 as one fused pallas_call.

    `prepared` is the output of prepare_params (6 arrays, plain Linear) or
    prepare_noisy_params (18 arrays, NoisyLinear with noise=True).
    """
    noisy = len(prepared) == 18
    B, F = x.shape
    if noisy:
        w1, w2, w3 = prepared[0], prepared[6], prepared[12]
    else:
        w1, w2, w3 = prepared[0], prepared[2], prepared[4]
    H1, H2, O = w1.shape[1], w2.shape[1], w3.shape[1]
    cdt = jnp.dtype(w1.dtype)

    # Batch tile: plain path keeps >=2 grid steps when possible (so the
    # "parallel" axis can shard over v7x's 2 TensorCores); noisy path runs on
    # one core ("arbitrary" axis, scratch init at step 0) so it prefers one
    # big tile to amortize per-step overhead.
    if noisy:
        TB = min(_round_up(block_b, SUBLANE), _round_up(B, SUBLANE))
    else:
        TB = min(_round_up(block_b, SUBLANE),
                 max(SUBLANE, _round_up(pl.cdiv(B, 2), SUBLANE)))
    grid = (pl.cdiv(B, TB),)   # ragged last tile: over-read rows are undefined
                               # but independent and never written back.

    # x / out tiles march over the batch grid; params stay VMEM-resident.
    x_spec = pl.BlockSpec((TB, F), lambda i: (i, 0))
    out_spec = pl.BlockSpec((TB, O), lambda i: (i, 0))
    resident = lambda a: pl.BlockSpec(a.shape, lambda i: (0, 0))
    in_specs = [x_spec] + [resident(a) for a in prepared]

    if noisy:
        kernel = _noisy_mlp_kernel
        scratch_shapes = [pltpu.VMEM((F, H1), cdt),
                          pltpu.VMEM((H1, H2), cdt),
                          pltpu.VMEM((H2, O), cdt),
                          pltpu.VMEM((1, H1), jnp.float32),
                          pltpu.VMEM((1, H2), jnp.float32),
                          pltpu.VMEM((1, O), jnp.float32)]
        semantics = ("arbitrary",)
    else:
        kernel = _mlp_kernel
        scratch_shapes = []
        semantics = ("parallel",)

    # VMEM budget: actual requirement (residents counted 2x for buffering,
    # double-buffered x/out tiles, f32+bf16 intermediates, noisy scratch)
    # + 25% margin, clamped to a generation-aware cap.
    resident_bytes = sum(int(a.size) * a.dtype.itemsize for a in prepared)
    scratch_bytes = ((F * H1 + H1 * H2 + H2 * O) * cdt.itemsize
                     + (H1 + H2 + O) * 4) if noisy else 0
    io_bytes = 2 * TB * F * x.dtype.itemsize + 2 * TB * O * 4
    act_bytes = TB * (H1 + H2) * (4 + cdt.itemsize) + TB * O * 4
    need = 2 * resident_bytes + scratch_bytes + io_bytes + act_bytes
    vmem_limit = int(min(_vmem_cap_bytes(),
                         max(16 * 1024 * 1024, int(need * 1.25))))

    return pl.pallas_call(
        kernel,
        out_shape=jax.ShapeDtypeStruct((B, O), jnp.float32),
        grid_spec=pltpu.PrefetchScalarGridSpec(
            num_scalar_prefetch=0,
            grid=grid,
            in_specs=in_specs,
            out_specs=out_spec,
            scratch_shapes=scratch_shapes),
        compiler_params=pltpu.CompilerParams(
            dimension_semantics=semantics,
            vmem_limit_bytes=vmem_limit),
    )(x, *prepared)


# ----------------------------------------------------------------------------
# Init + pure-JAX reference
# ----------------------------------------------------------------------------
def init_params(key, input_features, output_values):
    """PyTorch nn.Linear-style init (uniform +-1/sqrt(fan_in)); w stored (in, out)."""
    dims = [(input_features, 512), (512, 128), (128, output_values)]
    params = []
    for fan_in, fan_out in dims:
        kw, kb, key = jax.random.split(key, 3)
        bound = float(fan_in) ** -0.5
        w = jax.random.uniform(kw, (fan_in, fan_out), jnp.float32, -bound, bound)
        b = jax.random.uniform(kb, (1, fan_out), jnp.float32, -bound, bound)
        params += [w, b]
    return params


def init_noisy_params(key, input_features, output_values, sigma_init=0.017):
    """NoisyLinear extras: sigma (constant init) and resampled eps ~ N(0,1)."""
    dims = [(input_features, 512), (512, 128), (128, output_values)]
    noisy = []
    for fan_in, fan_out in dims:
        kw, kb, key = jax.random.split(key, 3)
        noisy += [jnp.full((fan_in, fan_out), sigma_init, jnp.float32),
                  jax.random.normal(kw, (fan_in, fan_out), jnp.float32),
                  jnp.full((1, fan_out), sigma_init, jnp.float32),
                  jax.random.normal(kb, (1, fan_out), jnp.float32)]
    return tuple(noisy)


def reference_forward(x, params, noisy_params=None, compute_dtype=None):
    """Plain-JAX reference. compute_dtype=bf16 mimics the kernel's MXU dtype."""
    w1, b1, w2, b2, w3, b3 = params
    if noisy_params is not None:
        (sw1, ew1, sb1, eb1, sw2, ew2, sb2, eb2, sw3, ew3, sb3, eb3) = noisy_params
        w1, b1 = w1 + sw1 * ew1, b1 + sb1 * eb1
        w2, b2 = w2 + sw2 * ew2, b2 + sb2 * eb2
        w3, b3 = w3 + sw3 * ew3, b3 + sb3 * eb3

    cast = (lambda a: a) if compute_dtype is None else (lambda a: a.astype(compute_dtype))

    def dot(a, b):
        return jnp.dot(cast(a), cast(b), preferred_element_type=jnp.float32)

    h1 = jnp.maximum(dot(x, w1) + b1, 0.0)
    h2 = jnp.maximum(dot(h1, w2) + b2, 0.0)
    return dot(h2, w3) + b3


if __name__ == "__main__":
    key = jax.random.PRNGKey(0)
    kx, kp, kn, kx2 = jax.random.split(key, 4)

    batch = 4
    input_features = 32
    output_values = 6

    x = jax.random.normal(kx, (batch, input_features), jnp.float32)
    params = init_params(kp, input_features, output_values)

    # --- noisy=False path (Model(noisy=False)) ---
    prep = prepare_params(params)
    out = jax.block_until_ready(mlp_forward(x, prep))
    assert out.shape == (batch, output_values)
    ref_bf16 = reference_forward(x, params, compute_dtype=jnp.bfloat16)
    ref_f32 = reference_forward(x, params)
    assert jnp.allclose(out, ref_bf16, atol=1e-2, rtol=1e-2), "mismatch vs bf16 reference"
    assert jnp.allclose(out, ref_f32, atol=5e-2, rtol=5e-2), "mismatch vs f32 reference"

    # --- noisy=True path (NoisyLinear, noise=True), w+sigma*eps fused in-kernel ---
    noisy_params = init_noisy_params(kn, input_features, output_values)
    prep_n = prepare_noisy_params(params, noisy_params)
    out_n = jax.block_until_ready(mlp_forward(x, prep_n))
    assert out_n.shape == (batch, output_values)
    ref_n_bf16 = reference_forward(x, params, noisy_params, compute_dtype=jnp.bfloat16)
    ref_n_f32 = reference_forward(x, params, noisy_params)
    assert jnp.allclose(out_n, ref_n_bf16, atol=1e-2, rtol=1e-2), "noisy mismatch vs bf16 ref"
    assert jnp.allclose(out_n, ref_n_f32, atol=5e-2, rtol=5e-2), "noisy mismatch vs f32 ref"

    # --- multi-tile + ragged-batch path (exercises scratch reuse across tiles
    #     and the ragged final tile) ---
    batch2 = 20
    x2 = jax.random.normal(kx2, (batch2, input_features), jnp.float32)
    out2 = jax.block_until_ready(mlp_forward(x2, prep, block_b=8))
    out2_n = jax.block_until_ready(mlp_forward(x2, prep_n, block_b=8))
    assert out2.shape == (batch2, output_values)
    assert out2_n.shape == (batch2, output_values)
    ref2 = reference_forward(x2, params, compute_dtype=jnp.bfloat16)
    ref2_n = reference_forward(x2, params, noisy_params, compute_dtype=jnp.bfloat16)
    assert jnp.allclose(out2, ref2, atol=1e-2, rtol=1e-2), "multi-tile mismatch"
    assert jnp.allclose(out2_n, ref2_n, atol=1e-2, rtol=1e-2), "multi-tile noisy mismatch"

    print("KERNEL_OK")
</pallas_src>

<mosaic_0001>
module attributes {stable_mosaic.version = 11 : i64} {
  func.func @_mlp_kernel(%arg0: i32, %arg1: memref<8x32xf32, #tpu.memory_space<vmem>>, %arg2: memref<32x512xbf16, #tpu.memory_space<vmem>>, %arg3: memref<1x512xf32, #tpu.memory_space<vmem>>, %arg4: memref<512x128xbf16, #tpu.memory_space<vmem>>, %arg5: memref<1x128xf32, #tpu.memory_space<vmem>>, %arg6: memref<128x6xbf16, #tpu.memory_space<vmem>>, %arg7: memref<1x6xf32, #tpu.memory_space<vmem>>, %arg8: memref<8x6xf32, #tpu.memory_space<vmem>>) attributes {dimension_semantics = [#tpu.dimension_semantics<parallel>], iteration_bounds = array<i64: 1>, scalar_prefetch = 0 : i64, scratch_operands = 0 : i64, tpu.core_type = #tpu.core_type<tc>, window_params = [{transform_indices = @transform_0, window_bounds = array<i64: 8, 32>}, {pipeline_mode = #tpu.pipeline_mode<synchronous>, transform_indices = @transform_1, window_bounds = array<i64: 32, 512>}, {pipeline_mode = #tpu.pipeline_mode<synchronous>, transform_indices = @transform_2, window_bounds = array<i64: 1, 512>}, {pipeline_mode = #tpu.pipeline_mode<synchronous>, transform_indices = @transform_3, window_bounds = array<i64: 512, 128>}, {pipeline_mode = #tpu.pipeline_mode<synchronous>, transform_indices = @transform_4, window_bounds = array<i64: 1, 128>}, {pipeline_mode = #tpu.pipeline_mode<synchronous>, transform_indices = @transform_5, window_bounds = array<i64: 128, 6>}, {pipeline_mode = #tpu.pipeline_mode<synchronous>, transform_indices = @transform_6, window_bounds = array<i64: 1, 6>}, {transform_indices = @transform_7, window_bounds = array<i64: 8, 6>}]} {
    %c0 = arith.constant 0 : index
    %c0_0 = arith.constant 0 : index
    %0 = vector.load %arg1[%c0, %c0_0] : memref<8x32xf32, #tpu.memory_space<vmem>>, vector<8x32xf32>
    %1 = arith.truncf %0 : vector<8x32xf32> to vector<8x32xbf16>
    %c0_1 = arith.constant 0 : index
    %c0_2 = arith.constant 0 : index
    %2 = vector.load %arg2[%c0_1, %c0_2] : memref<32x512xbf16, #tpu.memory_space<vmem>>, vector<32x512xbf16>
    %cst = arith.constant dense<0.000000e+00> : vector<8x512xf32>
    %3 = tpu.matmul %1, %2, %cst {dimension_numbers = #tpu.dot_dimension_numbers<[1], [0], [0], [1], [0, 0, 1, 1], [], []>} : vector<8x32xbf16>, vector<32x512xbf16>, vector<8x512xf32> -> vector<8x512xf32>
    %c0_3 = arith.constant 0 : index
    %c0_4 = arith.constant 0 : index
    %4 = vector.load %arg3[%c0_3, %c0_4] : memref<1x512xf32, #tpu.memory_space<vmem>>, vector<1x512xf32>
    %5 = vector.broadcast %4 : vector<1x512xf32> to vector<8x512xf32>
    %6 = arith.addf %3, %5 : vector<8x512xf32>
    %cst_5 = arith.constant 0.000000e+00 : f32
    %7 = vector.broadcast %cst_5 : f32 to vector<8x512xf32>
    %8 = arith.maximumf %6, %7 : vector<8x512xf32>
    %9 = arith.truncf %8 : vector<8x512xf32> to vector<8x512xbf16>
    %c0_6 = arith.constant 0 : index
    %c0_7 = arith.constant 0 : index
    %10 = vector.load %arg4[%c0_6, %c0_7] : memref<512x128xbf16, #tpu.memory_space<vmem>>, vector<512x128xbf16>
    %cst_8 = arith.constant dense<0.000000e+00> : vector<8x128xf32>
    %11 = tpu.matmul %9, %10, %cst_8 {dimension_numbers = #tpu.dot_dimension_numbers<[1], [0], [0], [1], [0, 0, 1, 1], [], []>} : vector<8x512xbf16>, vector<512x128xbf16>, vector<8x128xf32> -> vector<8x128xf32>
    %c0_9 = arith.constant 0 : index
    %c0_10 = arith.constant 0 : index
    %12 = vector.load %arg5[%c0_9, %c0_10] : memref<1x128xf32, #tpu.memory_space<vmem>>, vector<1x128xf32>
    %13 = vector.broadcast %12 : vector<1x128xf32> to vector<8x128xf32>
    %14 = arith.addf %11, %13 : vector<8x128xf32>
    %cst_11 = arith.constant 0.000000e+00 : f32
    %15 = vector.broadcast %cst_11 : f32 to vector<8x128xf32>
    %16 = arith.maximumf %14, %15 : vector<8x128xf32>
    %17 = arith.truncf %16 : vector<8x128xf32> to vector<8x128xbf16>
    %c0_12 = arith.constant 0 : index
    %c0_13 = arith.constant 0 : index
    %18 = vector.load %arg6[%c0_12, %c0_13] : memref<128x6xbf16, #tpu.memory_space<vmem>>, vector<128x6xbf16>
    %cst_14 = arith.constant dense<0.000000e+00> : vector<8x6xf32>
    %19 = tpu.matmul %17, %18, %cst_14 {dimension_numbers = #tpu.dot_dimension_numbers<[1], [0], [0], [1], [0, 0, 1, 1], [], []>} : vector<8x128xbf16>, vector<128x6xbf16>, vector<8x6xf32> -> vector<8x6xf32>
    %c0_15 = arith.constant 0 : index
    %c0_16 = arith.constant 0 : index
    %20 = vector.load %arg7[%c0_15, %c0_16] : memref<1x6xf32, #tpu.memory_space<vmem>>, vector<1x6xf32>
    %21 = vector.broadcast %20 : vector<1x6xf32> to vector<8x6xf32>
    %22 = arith.addf %19, %21 : vector<8x6xf32>
    %c0_17 = arith.constant 0 : index
    %c0_18 = arith.constant 0 : index
    %23 = vector.load %arg8[%c0_17, %c0_18] : memref<8x6xf32, #tpu.memory_space<vmem>>, vector<8x6xf32>
    tpu.vector_store %arg8[%c0_17, %c0_18], %22 {strides = array<i32>} : memref<8x6xf32, #tpu.memory_space<vmem>>, vector<8x6xf32>,
    return
  }
  func.func @transform_0(%arg0: i32) -> (i32, i32) {
    %c0_i32 = arith.constant 0 : i32
    %c0_i32_0 = arith.constant 0 : i32
    return %arg0, %c0_i32 : i32, i32
  }
  func.func @transform_1(%arg0: i32) -> (i32, i32) {
    %c0_i32 = arith.constant 0 : i32
    %c0_i32_0 = arith.constant 0 : i32
    %c0_i32_1 = arith.constant 0 : i32
    return %c0_i32, %c0_i32_0 : i32, i32
  }
  func.func @transform_2(%arg0: i32) -> (i32, i32) {
    %c0_i32 = arith.constant 0 : i32
    %c0_i32_0 = arith.constant 0 : i32
    %c0_i32_1 = arith.constant 0 : i32
    return %c0_i32, %c0_i32_0 : i32, i32
  }
  func.func @transform_3(%arg0: i32) -> (i32, i32) {
    %c0_i32 = arith.constant 0 : i32
    %c0_i32_0 = arith.constant 0 : i32
    %c0_i32_1 = arith.constant 0 : i32
    return %c0_i32, %c0_i32_0 : i32, i32
  }
  func.func @transform_4(%arg0: i32) -> (i32, i32) {
    %c0_i32 = arith.constant 0 : i32
    %c0_i32_0 = arith.constant 0 : i32
    %c0_i32_1 = arith.constant 0 : i32
    return %c0_i32, %c0_i32_0 : i32, i32
  }
  func.func @transform_5(%arg0: i32) -> (i32, i32) {
    %c0_i32 = arith.constant 0 : i32
    %c0_i32_0 = arith.constant 0 : i32
    %c0_i32_1 = arith.constant 0 : i32
    return %c0_i32, %c0_i32_0 : i32, i32
  }
  func.func @transform_6(%arg0: i32) -> (i32, i32) {
    %c0_i32 = arith.constant 0 : i32
    %c0_i32_0 = arith.constant 0 : i32
    %c0_i32_1 = arith.constant 0 : i32
    return %c0_i32, %c0_i32_0 : i32, i32
  }
  func.func @transform_7(%arg0: i32) -> (i32, i32) {
    %c0_i32 = arith.constant 0 : i32
    %c0_i32_0 = arith.constant 0 : i32
    return %arg0, %c0_i32 : i32, i32
  }
}

</mosaic_0001>

<llo_original>
// kernel: tpu_custom_call.1
$region0: #{tpu_custom_call.1}
  #allocation0 [shape = 'u32[]', space=smem, size = 0x4, offset = 0x4, fixed_abs, tag = 'smem constant byte address 0x4 - core index']
  #allocation1 [shape = 'u32[144,128]{1,0:T(1,128)}', space=vmem, size = 0x12000, scoped, tag = 'internal scratch']
  %s0 = inlined_call_operand.vmem [shape: f32[4,32], index: 0, kind: input, shape index: {}]
  %s1 = inlined_call_operand.vmem [shape: bf16[32,512], index: 1, kind: input, shape index: {}]
  %s2 = inlined_call_operand.hbm [shape: f32[1,512], index: 2, kind: input, shape index: {}]
  %s3 = inlined_call_operand.hbm [shape: bf16[512,128], index: 3, kind: input, shape index: {}]
  %s4 = inlined_call_operand.vmem [shape: f32[1,128], index: 4, kind: input, shape index: {}]
  %s5 = inlined_call_operand.vmem [shape: bf16[128,6], index: 5, kind: input, shape index: {}]
  %s6 = inlined_call_operand.vmem [shape: f32[1,6], index: 6, kind: input, shape index: {}]
  %s7 = inlined_call_operand.hbm [shape: f32[4,6], index: 7, kind: output, shape index: {}]
  %s8 = sld [smem:[#allocation0]]
  $region46: #{tpu_custom_call.1} parent=0
    _
  %s10 = ssub.s32 1, %s8
  %s11 = scalar_select 0, %s10, %s8
  $region1: #{tpu_custom_call.1} parent=0
    #allocation2 [shape = 'u8[2048]{0}', space=vmem, size = 0x800, scoped, tag = 'input window, operand 2, single buffered']
    #allocation3 [shape = 's32[1]{0}', space=sflag, size = 0x4, scoped, tag = 'scoped memory for tpu_custom_call.1']
    #allocation4 [shape = 's32[1]{0}', space=sflag, size = 0x4, scoped, tag = 'scoped memory for tpu_custom_call.1']
    #allocation5 [shape = 'u8[131072]{0}', space=vmem, size = 0x20000, scoped, tag = 'input window, operand 3, single buffered']
    #allocation6 [shape = 's32[1]{0}', space=sflag, size = 0x4, scoped, tag = 'scoped memory for tpu_custom_call.1']
    #allocation7 [shape = 'u8[4096]{0}', space=vmem, size = 0x1000, scoped, tag = 'output window, operand 0, single buffered']
    %12 = vsyncpa [#allocation3], 0
    %13 = vsyncpa [#allocation6], 0
    %14 = vsyncpa [#allocation4], 0
    // Predicated region
    $region2: #{tpu_custom_call.1} parent=1 // pred_check
      _
    $region3: #{tpu_custom_call.1} parent=1 // pred_check_branch
      %16 = sbr.rel (0) target = $region5
    $region4: #{tpu_custom_call.1} parent=1 // pred_region
      _
    $region5: #{tpu_custom_call.1} parent=1 // pred_fallthru
      _
    // Predicated region
    $region6: #{tpu_custom_call.1} parent=1 // pred_check
      _
    $region7: #{tpu_custom_call.1} parent=1 // pred_check_branch
      %18 = sbr.rel (0) target = $region9
    $region8: #{tpu_custom_call.1} parent=1 // pred_region
      _
    $region9: #{tpu_custom_call.1} parent=1 // pred_fallthru
      _
    // Predicated region
    $region10: #{tpu_custom_call.1} parent=1 // pred_check
      _
    $region11: #{tpu_custom_call.1} parent=1 // pred_check_branch
      %20 = sbr.rel (0) target = $region13
    $region12: #{tpu_custom_call.1} parent=1 // pred_region
      %s22 = ssub.s32 64, 64
      %23 = vsyncadd [#allocation3], %s22
      %s25 = sshll.u32 [#allocation2], 4
      %s26 = int_to_ptr.vmem [resolvable:$true] %s25
      %28 = dma.hbm_to_vmem [thread:$0]  %s2, 64, %s26, [#allocation3]
    $region13: #{tpu_custom_call.1} parent=1 // pred_fallthru
      _
    // Predicated region
    $region14: #{tpu_custom_call.1} parent=1 // pred_check
      _
    $region15: #{tpu_custom_call.1} parent=1 // pred_check_branch
      %30 = sbr.rel (0) target = $region17
    $region16: #{tpu_custom_call.1} parent=1 // pred_region
      %s32 = ssub.s32 4096, 4096
      %33 = vsyncadd [#allocation6], %s32
      %s34 = sshll.u32 [#allocation5], 4
      %s35 = int_to_ptr.vmem [resolvable:$true] %s34
      %40 = dma.hbm_to_vmem [thread:$0]  %s3, 4096, %s35, [#allocation6], 64, 64, 4
    $region17: #{tpu_custom_call.1} parent=1 // pred_fallthru
      _
    // Predicated region
    $region18: #{tpu_custom_call.1} parent=1 // pred_check
      _
    $region19: #{tpu_custom_call.1} parent=1 // pred_check_branch
      %42 = sbr.rel (0) target = $region21
    $region20: #{tpu_custom_call.1} parent=1 // pred_region
      _
    $region21: #{tpu_custom_call.1} parent=1 // pred_fallthru
      _
    // Predicated region
    $region22: #{tpu_custom_call.1} parent=1 // pred_check
      _
    $region23: #{tpu_custom_call.1} parent=1 // pred_check_branch
      %44 = sbr.rel (0) target = $region25
    $region24: #{tpu_custom_call.1} parent=1 // pred_region
      _
    $region25: #{tpu_custom_call.1} parent=1 // pred_fallthru
      _
    // Predicated region
    $region26: #{tpu_custom_call.1} parent=1 // pred_check
      _
    $region27: #{tpu_custom_call.1} parent=1 // pred_check_branch
      %46 = sbr.rel (0) target = $region29
    $region28: #{tpu_custom_call.1} parent=1 // pred_region
      _
    $region29: #{tpu_custom_call.1} parent=1 // pred_fallthru
      _
    // Predicated region
    $region30: #{tpu_custom_call.1} parent=1 // pred_check
      _
    $region31: #{tpu_custom_call.1} parent=1 // pred_check_branch
      %48 = sbr.rel (0) target = $region33
    $region32: #{tpu_custom_call.1} parent=1 // pred_region
      %49 = dma.done [#allocation3], 64
    $region33: #{tpu_custom_call.1} parent=1 // pred_fallthru
      _
    // Predicated region
    $region34: #{tpu_custom_call.1} parent=1 // pred_check
      _
    $region35: #{tpu_custom_call.1} parent=1 // pred_check_branch
      %51 = sbr.rel (0) target = $region37
    $region36: #{tpu_custom_call.1} parent=1 // pred_region
      %52 = dma.done [#allocation6], 4096
    $region37: #{tpu_custom_call.1} parent=1 // pred_fallthru
      _
    %v54 = vld [vmem:[%s0] sm:$0xff]
    %v55 = vpack.c.bf16 %v54, %v54
    %v56 = vld [vmem:[%s1] sm:$0xff]
    %v57 = vld [vmem:[%s1 + $0x8] sm:$0xff]
    %v58 = vld [vmem:[%s1 + $0x10] sm:$0xff]
    %v59 = vld [vmem:[%s1 + $0x18] sm:$0xff]
    %v60 = vld [vmem:[%s1 + $0x20] sm:$0xff]
    %v61 = vld [vmem:[%s1 + $0x28] sm:$0xff]
    %v62 = vld [vmem:[%s1 + $0x30] sm:$0xff]
    %v63 = vld [vmem:[%s1 + $0x38] sm:$0xff]
    %v64 = vld [vmem:[#allocation2] sm:$0xf]
    %v66 = vlaneseq
    %v67 = vshrl.u32 %v66, 7
    %v68 = vsub.s32 0, %v67
    %v69 = vrot.slane %v64, %v68
    %v70 = vlaneseq
    %v71 = vshrl.u32 %v70, 7
    %v72 = vsub.s32 1, %v71
    %v73 = vrot.slane %v64, %v72
    %v74 = vlaneseq
    %v75 = vshrl.u32 %v74, 7
    %v76 = vsub.s32 2, %v75
    %v77 = vrot.slane %v64, %v76
    %v78 = vlaneseq
    %v79 = vshrl.u32 %v78, 7
    %v80 = vsub.s32 3, %v79
    %v81 = vrot.slane %v64, %v80
    %v94 = vunpack.c.l.b16 %v56
    %v95 = vunpack.c.h.b16 %v56
    %v96 = vunpack.c.l.b16 %v57
    %v97 = vunpack.c.h.b16 %v57
    %v98 = vunpack.c.l.b16 %v58
    %v99 = vunpack.c.h.b16 %v58
    %v100 = vunpack.c.l.b16 %v59
    %v101 = vunpack.c.h.b16 %v59
    %v102 = vunpack.c.l.b16 %v60
    %v103 = vunpack.c.h.b16 %v60
    %v104 = vunpack.c.l.b16 %v61
    %v105 = vunpack.c.h.b16 %v61
    %v106 = vunpack.c.l.b16 %v62
    %v107 = vunpack.c.h.b16 %v62
    %v108 = vunpack.c.l.b16 %v63
    %v109 = vunpack.c.h.b16 %v63
    %v110 = vpack.c.b16 %v98, %v94
    %v111 = vpack.c.b16 %v99, %v95
    %v112 = vpack.c.b16 %v100, %v96
    %v113 = vpack.c.b16 %v101, %v97
    %v114 = vpack.c.b16 %v106, %v102
    %v115 = vpack.c.b16 %v107, %v103
    %v116 = vpack.c.b16 %v108, %v104
    %v117 = vpack.c.b16 %v109, %v105
    %vm126 = vcmask 261120
    %v128 = vsel %vm126, %v55, 0
    %130 = vmatprep.subr.bf16.mxu0 0
    %131 = vmatpush1.bf16.msra.mxu0 0
    %132 = vmatprep.subr.bf16.mxu0 0
    %133 = vmatpush1.bf16.msra.mxu0 0
    %134 = vmatprep.subr.bf16.mxu0 0
    %135 = vmatpush1.bf16.msra.mxu0 0
    %136 = vmatprep.subr.bf16.mxu0 0
    %137 = vmatpush1.bf16.msra.mxu0 0
    %138 = vmatprep.subr.bf16.mxu0 0
    %139 = vmatpush1.bf16.msra.mxu0 0
    %140 = vmatprep.subr.bf16.mxu0 0
    %141 = vmatpush1.bf16.msra.mxu0 0
    %142 = vmatprep.subr.bf16.mxu0 %v115
    %143 = vmatpush1.bf16.msra.mxu0 %v114
    %144 = vmatprep.subr.bf16.mxu0 %v111
    %145 = vmatpush1.bf16.msra.mxu0 %v110
    %146 = vmatprep.subr.bf16.mxu0 0
    %147 = vmatpush2.bf16.msra.mxu0 0
    %148 = vmatprep.subr.bf16.mxu0 0
    %149 = vmatpush2.bf16.msra.mxu0 0
    %150 = vmatprep.subr.bf16.mxu0 0
    %151 = vmatpush2.bf16.msra.mxu0 0
    %152 = vmatprep.subr.bf16.mxu0 0
    %153 = vmatpush2.bf16.msra.mxu0 0
    %154 = vmatprep.subr.bf16.mxu0 0
    %155 = vmatpush2.bf16.msra.mxu0 0
    %156 = vmatprep.subr.bf16.mxu0 0
    %157 = vmatpush2.bf16.msra.mxu0 0
    %158 = vmatprep.subr.bf16.mxu0 0
    %159 = vmatpush2.bf16.msra.mxu0 0
    %160 = vmatprep.subr.bf16.mxu0 0
    %161 = vmatpush2.bf16.msra.mxu0 0
    %162 = vmatprep.mubr.bf16.mxu0 0
    %163 = vmatmul.mubr.bf16.gmra.mxu0 %v128
    %v164 = vpop.f32.mrf.mxu0
    %v165 = vadd.f32 %v69, %v164
    %v166 = vpop.f32.mrf.mxu0
    %v167 = vadd.f32 %v73, %v166
    %v168 = vpop.f32.mrf.mxu0
    %v169 = vpop.f32.mrf.mxu0
    %170 = vdwg.mxu0
    %171 = vmatprep.subr.bf16.mxu0 0
    %172 = vmatpush1.bf16.msra.mxu0 0
    %173 = vmatprep.subr.bf16.mxu0 0
    %174 = vmatpush1.bf16.msra.mxu0 0
    %175 = vmatprep.subr.bf16.mxu0 0
    %176 = vmatpush1.bf16.msra.mxu0 0
    %177 = vmatprep.subr.bf16.mxu0 0
    %178 = vmatpush1.bf16.msra.mxu0 0
    %179 = vmatprep.subr.bf16.mxu0 0
    %180 = vmatpush1.bf16.msra.mxu0 0
    %181 = vmatprep.subr.bf16.mxu0 0
    %182 = vmatpush1.bf16.msra.mxu0 0
    %183 = vmatprep.subr.bf16.mxu0 %v117
    %184 = vmatpush1.bf16.msra.mxu0 %v116
    %185 = vmatprep.subr.bf16.mxu0 %v113
    %186 = vmatpush1.bf16.msra.mxu0 %v112
    %187 = vmatprep.subr.bf16.mxu0 0
    %188 = vmatpush2.bf16.msra.mxu0 0
    %189 = vmatprep.subr.bf16.mxu0 0
    %190 = vmatpush2.bf16.msra.mxu0 0
    %191 = vmatprep.subr.bf16.mxu0 0
    %192 = vmatpush2.bf16.msra.mxu0 0
    %193 = vmatprep.subr.bf16.mxu0 0
    %194 = vmatpush2.bf16.msra.mxu0 0
    %195 = vmatprep.subr.bf16.mxu0 0
    %196 = vmatpush2.bf16.msra.mxu0 0
    %197 = vmatprep.subr.bf16.mxu0 0
    %198 = vmatpush2.bf16.msra.mxu0 0
    %199 = vmatprep.subr.bf16.mxu0 0
    %200 = vmatpush2.bf16.msra.mxu0 0
    %201 = vmatprep.subr.bf16.mxu0 0
    %202 = vmatpush2.bf16.msra.mxu0 0
    %203 = vmatprep.mubr.bf16.mxu0 0
    %204 = vmatmul.mubr.bf16.gmra.mxu0 %v128
    %v205 = vpop.f32.mrf.mxu0
    %v206 = vadd.f32 %v77, %v205
    %v207 = vpop.f32.mrf.mxu0
    %v208 = vadd.f32 %v81, %v207
    %v209 = vpop.f32.mrf.mxu0
    %v210 = vpop.f32.mrf.mxu0
    %211 = vdwg.mxu0
    %v212 = vmax.f32 %v165, 0.0
    %v213 = vmax.f32 %v167, 0.0
    %v214 = vmax.f32 %v206, 0.0
    %v215 = vmax.f32 %v208, 0.0
    %v216 = vpack.c.bf16 %v212, %v212
    %v217 = vpack.c.bf16 %v213, %v213
    %v218 = vpack.c.bf16 %v214, %v214
    %v219 = vpack.c.bf16 %v215, %v215
    %v220 = vld [vmem:[#allocation5] sm:$0xf]
    %v221 = vld [vmem:[#allocation5 + $0x4] sm:$0xf]
    %v222 = vld [vmem:[#allocation5 + $0x8] sm:$0xf]
    %v223 = vld [vmem:[#allocation5 + $0xc] sm:$0xf]
    %v224 = vld [vmem:[#allocation5 + $0x10] sm:$0xf]
    %v225 = vld [vmem:[#allocation5 + $0x14] sm:$0xf]
    %v226 = vld [vmem:[#allocation5 + $0x18] sm:$0xf]
    %v227 = vld [vmem:[#allocation5 + $0x1c] sm:$0xf]
    %v228 = vld [vmem:[#allocation5 + $0x20] sm:$0xf]
    %v229 = vld [vmem:[#allocation5 + $0x24] sm:$0xf]
    %v230 = vld [vmem:[#allocation5 + $0x28] sm:$0xf]
    %v231 = vld [vmem:[#allocation5 + $0x2c] sm:$0xf]
    %v232 = vld [vmem:[#allocation5 + $0x30] sm:$0xf]
    %v233 = vld [vmem:[#allocation5 + $0x34] sm:$0xf]
    %v234 = vld [vmem:[#allocation5 + $0x38] sm:$0xf]
    %v235 = vld [vmem:[#allocation5 + $0x3c] sm:$0xf]
    %v236 = vld [vmem:[#allocation5 + $0x40] sm:$0xf]
    %v237 = vld [vmem:[#allocation5 + $0x44] sm:$0xf]
    %v238 = vld [vmem:[#allocation5 + $0x48] sm:$0xf]
    %v239 = vld [vmem:[#allocation5 + $0x4c] sm:$0xf]
    %v240 = vld [vmem:[#allocation5 + $0x50] sm:$0xf]
    %v241 = vld [vmem:[#allocation5 + $0x54] sm:$0xf]
    %v242 = vld [vmem:[#allocation5 + $0x58] sm:$0xf]
    %v243 = vld [vmem:[#allocation5 + $0x5c] sm:$0xf]
    %v244 = vld [vmem:[#allocation5 + $0x60] sm:$0xf]
    %v245 = vld [vmem:[#allocation5 + $0x64] sm:$0xf]
    %v246 = vld [vmem:[#allocation5 + $0x68] sm:$0xf]
    %v247 = vld [vmem:[#allocation5 + $0x6c] sm:$0xf]
    %v248 = vld [vmem:[#allocation5 + $0x70] sm:$0xf]
    %v249 = vld [vmem:[#allocation5 + $0x74] sm:$0xf]
    %v250 = vld [vmem:[#allocation5 + $0x78] sm:$0xf]
    %v251 = vld [vmem:[#allocation5 + $0x7c] sm:$0xf]
    %v252 = vld [vmem:[#allocation5 + $0x80] sm:$0xf]
    %v253 = vld [vmem:[#allocation5 + $0x84] sm:$0xf]
    %v254 = vld [vmem:[#allocation5 + $0x88] sm:$0xf]
    %v255 = vld [vmem:[#allocation5 + $0x8c] sm:$0xf]
    %v256 = vld [vmem:[#allocation5 + $0x90] sm:$0xf]
    %v257 = vld [vmem:[#allocation5 + $0x94] sm:$0xf]
    %v258 = vld [vmem:[#allocation5 + $0x98] sm:$0xf]
    %v259 = vld [vmem:[#allocation5 + $0x9c] sm:$0xf]
    %v260 = vld [vmem:[#allocation5 + $0xa0] sm:$0xf]
    %v261 = vld [vmem:[#allocation5 + $0xa4] sm:$0xf]
    %v262 = vld [vmem:[#allocation5 + $0xa8] sm:$0xf]
    %v263 = vld [vmem:[#allocation5 + $0xac] sm:$0xf]
    %v264 = vld [vmem:[#allocation5 + $0xb0] sm:$0xf]
    %v265 = vld [vmem:[#allocation5 + $0xb4] sm:$0xf]
    %v266 = vld [vmem:[#allocation5 + $0xb8] sm:$0xf]
    %v267 = vld [vmem:[#allocation5 + $0xbc] sm:$0xf]
    %v268 = vld [vmem:[#allocation5 + $0xc0] sm:$0xf]
    %v269 = vld [vmem:[#allocation5 + $0xc4] sm:$0xf]
    %v270 = vld [vmem:[#allocation5 + $0xc8] sm:$0xf]
    %v271 = vld [vmem:[#allocation5 + $0xcc] sm:$0xf]
    %v272 = vld [vmem:[#allocation5 + $0xd0] sm:$0xf]
    %v273 = vld [vmem:[#allocation5 + $0xd4] sm:$0xf]
    %v274 = vld [vmem:[#allocation5 + $0xd8] sm:$0xf]
    %v275 = vld [vmem:[#allocation5 + $0xdc] sm:$0xf]
    %v276 = vld [vmem:[#allocation5 + $0xe0] sm:$0xf]
    %v277 = vld [vmem:[#allocation5 + $0xe4] sm:$0xf]
    %v278 = vld [vmem:[#allocation5 + $0xe8] sm:$0xf]
    %v279 = vld [vmem:[#allocation5 + $0xec] sm:$0xf]
    %v280 = vld [vmem:[#allocation5 + $0xf0] sm:$0xf]
    %v281 = vld [vmem:[#allocation5 + $0xf4] sm:$0xf]
    %v282 = vld [vmem:[#allocation5 + $0xf8] sm:$0xf]
    %v283 = vld [vmem:[#allocation5 + $0xfc] sm:$0xf]
    %v284 = vld [vmem:[%s4] sm:$0x1]
    %v286 = vlaneseq
    %v287 = vshrl.u32 %v286, 7
    %v288 = vsub.s32 0, %v287
    %v289 = vrot.slane %v284, %v288
    %v355 = vunpack.c.l.b16 %v220
    %v356 = vunpack.c.l.b16 %v221
    %v357 = vunpack.c.l.b16 %v222
    %v358 = vunpack.c.l.b16 %v223
    %v359 = vunpack.c.l.b16 %v224
    %v360 = vunpack.c.l.b16 %v225
    %v361 = vunpack.c.l.b16 %v226
    %v362 = vunpack.c.l.b16 %v227
    %v363 = vunpack.c.l.b16 %v228
    %v364 = vunpack.c.l.b16 %v229
    %v365 = vunpack.c.l.b16 %v230
    %v366 = vunpack.c.l.b16 %v231
    %v367 = vunpack.c.l.b16 %v232
    %v368 = vunpack.c.l.b16 %v233
    %v369 = vunpack.c.l.b16 %v234
    %v370 = vunpack.c.l.b16 %v235
    %v371 = vunpack.c.l.b16 %v236
    %v372 = vunpack.c.l.b16 %v237
    %v373 = vunpack.c.l.b16 %v238
    %v374 = vunpack.c.l.b16 %v239
    %v375 = vunpack.c.l.b16 %v240
    %v376 = vunpack.c.l.b16 %v241
    %v377 = vunpack.c.l.b16 %v242
    %v378 = vunpack.c.l.b16 %v243
    %v379 = vunpack.c.l.b16 %v244
    %v380 = vunpack.c.l.b16 %v245
    %v381 = vunpack.c.l.b16 %v246
    %v382 = vunpack.c.l.b16 %v247
    %v383 = vunpack.c.l.b16 %v248
    %v384 = vunpack.c.l.b16 %v249
    %v385 = vunpack.c.l.b16 %v250
    %v386 = vunpack.c.l.b16 %v251
    %v387 = vunpack.c.l.b16 %v252
    %v388 = vunpack.c.l.b16 %v253
    %v389 = vunpack.c.l.b16 %v254
    %v390 = vunpack.c.l.b16 %v255
    %v391 = vunpack.c.l.b16 %v256
    %v392 = vunpack.c.l.b16 %v257
    %v393 = vunpack.c.l.b16 %v258
    %v394 = vunpack.c.l.b16 %v259
    %v395 = vunpack.c.l.b16 %v260
    %v396 = vunpack.c.l.b16 %v261
    %v397 = vunpack.c.l.b16 %v262
    %v398 = vunpack.c.l.b16 %v263
    %v399 = vunpack.c.l.b16 %v264
    %v400 = vunpack.c.l.b16 %v265
    %v401 = vunpack.c.l.b16 %v266
    %v402 = vunpack.c.l.b16 %v267
    %v403 = vunpack.c.l.b16 %v268
    %v404 = vunpack.c.l.b16 %v269
    %v405 = vunpack.c.l.b16 %v270
    %v406 = vunpack.c.l.b16 %v271
    %v407 = vunpack.c.l.b16 %v272
    %v408 = vunpack.c.l.b16 %v273
    %v409 = vunpack.c.l.b16 %v274
    %v410 = vunpack.c.l.b16 %v275
    %v411 = vunpack.c.l.b16 %v276
    %v412 = vunpack.c.l.b16 %v277
    %v413 = vunpack.c.l.b16 %v278
    %v414 = vunpack.c.l.b16 %v279
    %v415 = vunpack.c.l.b16 %v280
    %v416 = vunpack.c.l.b16 %v281
    %v417 = vunpack.c.l.b16 %v282
    %v418 = vunpack.c.l.b16 %v283
    %v419 = vpack.c.b16 %v356, %v355
    %v420 = vpack.c.b16 %v358, %v357
    %v421 = vpack.c.b16 %v360, %v359
    %v422 = vpack.c.b16 %v362, %v361
    %v423 = vpack.c.b16 %v364, %v363
    %v424 = vpack.c.b16 %v366, %v365
    %v425 = vpack.c.b16 %v368, %v367
    %v426 = vpack.c.b16 %v370, %v369
    %v427 = vpack.c.b16 %v372, %v371
    %v428 = vpack.c.b16 %v374, %v373
    %v429 = vpack.c.b16 %v376, %v375
    %v430 = vpack.c.b16 %v378, %v377
    %v431 = vpack.c.b16 %v380, %v379
    %v432 = vpack.c.b16 %v382, %v381
    %v433 = vpack.c.b16 %v384, %v383
    %v434 = vpack.c.b16 %v386, %v385
    %v435 = vpack.c.b16 %v388, %v387
    %v436 = vpack.c.b16 %v390, %v389
    %v437 = vpack.c.b16 %v392, %v391
    %v438 = vpack.c.b16 %v394, %v393
    %v439 = vpack.c.b16 %v396, %v395
    %v440 = vpack.c.b16 %v398, %v397
    %v441 = vpack.c.b16 %v400, %v399
    %v442 = vpack.c.b16 %v402, %v401
    %v443 = vpack.c.b16 %v404, %v403
    %v444 = vpack.c.b16 %v406, %v405
    %v445 = vpack.c.b16 %v408, %v407
    %v446 = vpack.c.b16 %v410, %v409
    %v447 = vpack.c.b16 %v412, %v411
    %v448 = vpack.c.b16 %v414, %v413
    %v449 = vpack.c.b16 %v416, %v415
    %v450 = vpack.c.b16 %v418, %v417
    %483 = vmatprep.subr.bf16.mxu0 0
    %484 = vmatpush1.bf16.msra.mxu0 %v426
    %485 = vmatprep.subr.bf16.mxu0 0
    %486 = vmatpush1.bf16.msra.mxu0 %v425
    %487 = vmatprep.subr.bf16.mxu0 0
    %488 = vmatpush1.bf16.msra.mxu0 %v424
    %489 = vmatprep.subr.bf16.mxu0 0
    %490 = vmatpush1.bf16.msra.mxu0 %v423
    %491 = vmatprep.subr.bf16.mxu0 0
    %492 = vmatpush1.bf16.msra.mxu0 %v422
    %493 = vmatprep.subr.bf16.mxu0 0
    %494 = vmatpush1.bf16.msra.mxu0 %v421
    %495 = vmatprep.subr.bf16.mxu0 0
    %496 = vmatpush1.bf16.msra.mxu0 %v420
    %497 = vmatprep.subr.bf16.mxu0 0
    %498 = vmatpush1.bf16.msra.mxu0 %v419
    %499 = vmatprep.subr.bf16.mxu0 0
    %500 = vmatpush2.bf16.msra.mxu0 %v434
    %501 = vmatprep.subr.bf16.mxu0 0
    %502 = vmatpush2.bf16.msra.mxu0 %v433
    %503 = vmatprep.subr.bf16.mxu0 0
    %504 = vmatpush2.bf16.msra.mxu0 %v432
    %505 = vmatprep.subr.bf16.mxu0 0
    %506 = vmatpush2.bf16.msra.mxu0 %v431
    %507 = vmatprep.subr.bf16.mxu0 0
    %508 = vmatpush2.bf16.msra.mxu0 %v430
    %509 = vmatprep.subr.bf16.mxu0 0
    %510 = vmatpush2.bf16.msra.mxu0 %v429
    %511 = vmatprep.subr.bf16.mxu0 0
    %512 = vmatpush2.bf16.msra.mxu0 %v428
    %513 = vmatprep.subr.bf16.mxu0 0
    %514 = vmatpush2.bf16.msra.mxu0 %v427
    %515 = vmatprep.mubr.bf16.mxu0 %v217
    %516 = vmatmul.mubr.bf16.gmra.mxu0 %v216
    %v517 = vpop.f32.mrf.mxu0
    %v518 = vadd.f32 %v289, %v517
    %v519 = vpop.f32.mrf.mxu0
    %v520 = vpop.f32.mrf.mxu0
    %v521 = vpop.f32.mrf.mxu0
    %522 = vdwg.mxu0
    %523 = vmatprep.subr.bf16.mxu0 0
    %524 = vmatpush1.bf16.msra.mxu0 %v442
    %525 = vmatprep.subr.bf16.mxu0 0
    %526 = vmatpush1.bf16.msra.mxu0 %v441
    %527 = vmatprep.subr.bf16.mxu0 0
    %528 = vmatpush1.bf16.msra.mxu0 %v440
    %529 = vmatprep.subr.bf16.mxu0 0
    %530 = vmatpush1.bf16.msra.mxu0 %v439
    %531 = vmatprep.subr.bf16.mxu0 0
    %532 = vmatpush1.bf16.msra.mxu0 %v438
    %533 = vmatprep.subr.bf16.mxu0 0
    %534 = vmatpush1.bf16.msra.mxu0 %v437
    %535 = vmatprep.subr.bf16.mxu0 0
    %536 = vmatpush1.bf16.msra.mxu0 %v436
    %537 = vmatprep.subr.bf16.mxu0 0
    %538 = vmatpush1.bf16.msra.mxu0 %v435
    %539 = vmatprep.subr.bf16.mxu0 0
    %540 = vmatpush2.bf16.msra.mxu0 %v450
    %541 = vmatprep.subr.bf16.mxu0 0
    %542 = vmatpush2.bf16.msra.mxu0 %v449
    %543 = vmatprep.subr.bf16.mxu0 0
    %544 = vmatpush2.bf16.msra.mxu0 %v448
    %545 = vmatprep.subr.bf16.mxu0 0
    %546 = vmatpush2.bf16.msra.mxu0 %v447
    %547 = vmatprep.subr.bf16.mxu0 0
    %548 = vmatpush2.bf16.msra.mxu0 %v446
    %549 = vmatprep.subr.bf16.mxu0 0
    %550 = vmatpush2.bf16.msra.mxu0 %v445
    %551 = vmatprep.subr.bf16.mxu0 0
    %552 = vmatpush2.bf16.msra.mxu0 %v444
    %553 = vmatprep.subr.bf16.mxu0 0
    %554 = vmatpush2.bf16.msra.mxu0 %v443
    %555 = vmatprep.mubr.bf16.mxu0 %v219
    %556 = vmatmul.mubr.bf16.gmra.mxu0 %v218
    %v557 = vpop.f32.mrf.mxu0
    %v558 = vadd.f32 %v518, %v557
    %v559 = vpop.f32.mrf.mxu0
    %v560 = vpop.f32.mrf.mxu0
    %v561 = vpop.f32.mrf.mxu0
    %562 = vdwg.mxu0
    %v563 = vmax.f32 %v558, 0.0
    %v564 = vpack.c.bf16 %v563, %v563
    %v565 = vld [vmem:[%s5] sm:$0xf]
    %v566 = vld [vmem:[%s5 + $0x4] sm:$0xf]
    %v567 = vld [vmem:[%s5 + $0x8] sm:$0xf]
    %v568 = vld [vmem:[%s5 + $0xc] sm:$0xf]
    %v569 = vld [vmem:[%s5 + $0x10] sm:$0xf]
    %v570 = vld [vmem:[%s5 + $0x14] sm:$0xf]
    %v571 = vld [vmem:[%s5 + $0x18] sm:$0xf]
    %v572 = vld [vmem:[%s5 + $0x1c] sm:$0xf]
    %v573 = vld [vmem:[%s5 + $0x20] sm:$0xf]
    %v574 = vld [vmem:[%s5 + $0x24] sm:$0xf]
    %v575 = vld [vmem:[%s5 + $0x28] sm:$0xf]
    %v576 = vld [vmem:[%s5 + $0x2c] sm:$0xf]
    %v577 = vld [vmem:[%s5 + $0x30] sm:$0xf]
    %v578 = vld [vmem:[%s5 + $0x34] sm:$0xf]
    %v579 = vld [vmem:[%s5 + $0x38] sm:$0xf]
    %v580 = vld [vmem:[%s5 + $0x3c] sm:$0xf]
    %v581 = vld [vmem:[%s6] sm:$0x1]
    %v583 = vlaneseq
    %v584 = vshrl.u32 %v583, 7
    %v585 = vsub.s32 0, %v584
    %v586 = vrot.slane %v581, %v585
    %v604 = vunpack.c.l.b16 %v565
    %v605 = vunpack.c.l.b16 %v566
    %v606 = vunpack.c.l.b16 %v567
    %v607 = vunpack.c.l.b16 %v568
    %v608 = vunpack.c.l.b16 %v569
    %v609 = vunpack.c.l.b16 %v570
    %v610 = vunpack.c.l.b16 %v571
    %v611 = vunpack.c.l.b16 %v572
    %v612 = vunpack.c.l.b16 %v573
    %v613 = vunpack.c.l.b16 %v574
    %v614 = vunpack.c.l.b16 %v575
    %v615 = vunpack.c.l.b16 %v576
    %v616 = vunpack.c.l.b16 %v577
    %v617 = vunpack.c.l.b16 %v578
    %v618 = vunpack.c.l.b16 %v579
    %v619 = vunpack.c.l.b16 %v580
    %v620 = vpack.c.b16 %v605, %v604
    %v621 = vpack.c.b16 %v607, %v606
    %v622 = vpack.c.b16 %v609, %v608
    %v623 = vpack.c.b16 %v611, %v610
    %v624 = vpack.c.b16 %v613, %v612
    %v625 = vpack.c.b16 %v615, %v614
    %v626 = vpack.c.b16 %v617, %v616
    %v627 = vpack.c.b16 %v619, %v618
    %636 = vmatprep.subr.bf16.mxu0 0
    %637 = vmatpush1.bf16.msra.mxu0 %v627
    %638 = vmatprep.subr.bf16.mxu0 0
    %639 = vmatpush1.bf16.msra.mxu0 %v626
    %640 = vmatprep.subr.bf16.mxu0 0
    %641 = vmatpush1.bf16.msra.mxu0 %v625
    %642 = vmatprep.subr.bf16.mxu0 0
    %643 = vmatpush1.bf16.msra.mxu0 %v624
    %644 = vmatprep.subr.bf16.mxu0 0
    %645 = vmatpush1.bf16.msra.mxu0 %v623
    %646 = vmatprep.subr.bf16.mxu0 0
    %647 = vmatpush1.bf16.msra.mxu0 %v622
    %648 = vmatprep.subr.bf16.mxu0 0
    %649 = vmatpush1.bf16.msra.mxu0 %v621
    %650 = vmatprep.subr.bf16.mxu0 0
    %651 = vmatpush1.bf16.msra.mxu0 %v620
    %652 = vmatprep.subr.bf16.mxu0 0
    %653 = vmatpush2.bf16.msra.mxu0 0
    %654 = vmatprep.subr.bf16.mxu0 0
    %655 = vmatpush2.bf16.msra.mxu0 0
    %656 = vmatprep.subr.bf16.mxu0 0
    %657 = vmatpush2.bf16.msra.mxu0 0
    %658 = vmatprep.subr.bf16.mxu0 0
    %659 = vmatpush2.bf16.msra.mxu0 0
    %660 = vmatprep.subr.bf16.mxu0 0
    %661 = vmatpush2.bf16.msra.mxu0 0
    %662 = vmatprep.subr.bf16.mxu0 0
    %663 = vmatpush2.bf16.msra.mxu0 0
    %664 = vmatprep.subr.bf16.mxu0 0
    %665 = vmatpush2.bf16.msra.mxu0 0
    %666 = vmatprep.subr.bf16.mxu0 0
    %667 = vmatpush2.bf16.msra.mxu0 0
    %668 = vmatprep.mubr.bf16.mxu0 0
    %669 = vmatmul.mubr.bf16.gmra.mxu0 %v564
    %v670 = vpop.f32.mrf.mxu0
    %v671 = vadd.f32 %v586, %v670
    %v672 = vpop.f32.mrf.mxu0
    %v673 = vpop.f32.mrf.mxu0
    %v674 = vpop.f32.mrf.mxu0
    %675 = vdwg.mxu0
    %vm676 = vcmask 48128
    %677 = vst.msk [vmem:[#allocation7] sm:$0xff] %vm676, %v671
    // Predicated region
    $region38: #{tpu_custom_call.1} parent=1 // pred_check
      _
    $region39: #{tpu_custom_call.1} parent=1 // pred_check_branch
      %679 = sbr.rel (0) target = $region41
    $region40: #{tpu_custom_call.1} parent=1 // pred_region
      %s681 = ssub.s32 128, 64
      %682 = vsyncadd [#allocation4], %s681
      %s683 = sshll.u32 [#allocation7], 4
      %s684 = int_to_ptr.vmem [resolvable:$true] %s683
      %689 = dma.vmem_to_hbm [thread:$0]  %s684, 64, %s7, [#allocation4], 64, 64, 4
    $region41: #{tpu_custom_call.1} parent=1 // pred_fallthru
      _
    // Predicated region
    $region42: #{tpu_custom_call.1} parent=1 // pred_check
      _
    $region43: #{tpu_custom_call.1} parent=1 // pred_check_branch
      %691 = sbr.rel (0) target = $region45
    $region44: #{tpu_custom_call.1} parent=1 // pred_region
      %692 = dma.done [#allocation4], 128
    $region45: #{tpu_custom_call.1} parent=1 // pred_fallthru
      _
    %693 = vsyncpa [#allocation3], 1
    %694 = vsyncpa [#allocation6], 1
    %695 = vsyncpa [#allocation4], 1

</llo_original>
